<compile_context>
chip_gen: v5e
topology: v5e:2x2
jax: 0.10.0
libtpu: 0.0.40
codegen_flags: <defaults>
</compile_context>

<pallas_src>
import jax
import jax.numpy as jnp
import numpy as np
from jax.experimental import pallas as pl
from jax.experimental.pallas import tpu as pltpu


def _channel_wise_kernel(x_ref, gamma_ref, o_ref):
    # x_ref:     (NB, C, HWp)   NB batch elements, spatial on lanes
    # gamma_ref: (1,) f32 in SMEM
    # o_ref:     (NB, C, HWp)
    xv = x_ref[...].astype(jnp.float32)

    # Channel Gram matrix on the MXU: (NB, C, C). Zero-padded spatial columns
    # (and zero-padded batch rows) contribute nothing, so padding is exact.
    a = jnp.einsum("bcx,bdx->bcd", xv, xv, preferred_element_type=jnp.float32)

    # Numerically-stable softmax over the last axis.
    m = jnp.max(a, axis=-1, keepdims=True)
    e = jnp.exp(a - m)
    p = e / jnp.sum(e, axis=-1, keepdims=True)

    # Attention-weighted channel mix on the MXU: (NB, C, HWp).
    y = jnp.einsum("bcd,bdx->bcx", p, xv, preferred_element_type=jnp.float32)

    o_ref[...] = (gamma_ref[0] * y).astype(o_ref.dtype)


def channel_wise_forward(x, gamma, *, nb_max=8):
    """x: (B, C, H, W); gamma: scalar learnable parameter (nn.Parameter(zeros(1)))."""
    B, C, H, W = x.shape
    HW = H * W
    HWp = pl.cdiv(HW, 128) * 128          # lane-dense spatial axis (unmasked vst)

    # Batch block size: fill the grid step without blowing the VMEM budget
    # (in + out tiles, double-buffered).
    # TODO(synk): for very large C*H*W planes (e.g. 64x224x224 on v7x's 64 MiB
    # VMEM) add an HW tile with a two-pass Gram/apply pipeline instead of
    # whole-plane blocks.
    per_b_bytes = C * HWp * x.dtype.itemsize
    vmem_budget = 24 * 1024 * 1024
    NB = max(1, min(nb_max, B, vmem_budget // max(1, 4 * per_b_bytes)))
    Bp = pl.cdiv(B, NB) * NB

    x_flat = x.reshape(B, C, HW)
    if Bp != B or HWp != HW:
        # Zero padding is semantics-preserving: padded spatial columns / batch
        # rows only produce zeros that are sliced away below.
        x_flat = jnp.pad(x_flat, ((0, Bp - B), (0, 0), (0, HWp - HW)))

    gamma_arr = jnp.asarray(gamma, dtype=jnp.float32).reshape(1)

    out = pl.pallas_call(
        _channel_wise_kernel,
        out_shape=jax.ShapeDtypeStruct((Bp, C, HWp), x.dtype),
        grid=(Bp // NB,),
        in_specs=[
            pl.BlockSpec((NB, C, HWp), lambda b: (b, 0, 0)),
            pl.BlockSpec(memory_space=pltpu.MemorySpace.SMEM),   # gamma scalar
        ],
        out_specs=pl.BlockSpec((NB, C, HWp), lambda b: (b, 0, 0)),
        compiler_params=pltpu.CompilerParams(
            dimension_semantics=("parallel",),   # batch blocks are independent
            vmem_limit_bytes=32 * 1024 * 1024,
        ),
    )(x_flat, gamma_arr)

    return out[:B, :, :HW].reshape(B, C, H, W)


def channel_wise_reference(x, gamma):
    # pure-JAX reference of the PyTorch forward
    B, C, H, W = x.shape
    x_re = x.reshape(B, C, H * W).astype(jnp.float32)
    a = jnp.einsum("bcx,bdx->bcd", x_re, x_re)
    p = jax.nn.softmax(a, axis=-1)
    y = jnp.einsum("bcd,bdx->bcx", p, x_re)
    return (gamma * y).reshape(B, C, H, W).astype(x.dtype)


if __name__ == "__main__":
    key = jax.random.PRNGKey(0)
    B, C, H, W = 2, 4, 16, 16
    x = jax.random.normal(key, (B, C, H, W), dtype=jnp.float32)
    # nn.Parameter(torch.zeros(1)) initializes gamma to 0 (output would be all
    # zeros); use a nonzero learned-style value so the check is meaningful.
    gamma = jnp.float32(0.5)

    out = channel_wise_forward(x, gamma)
    out = jax.block_until_ready(out)

    ref = channel_wise_reference(x, gamma)
    np.testing.assert_allclose(np.asarray(out), np.asarray(ref), rtol=1e-4, atol=1e-4)

    print("KERNEL_OK")
</pallas_src>

<mosaic_0001>
module attributes {stable_mosaic.version = 11 : i64} {
  func.func @_channel_wise_kernel(%arg0: i32, %arg1: memref<2x4x256xf32, #tpu.memory_space<vmem>>, %arg2: memref<1xf32, #tpu.memory_space<smem>>, %arg3: memref<2x4x256xf32, #tpu.memory_space<vmem>>) attributes {dimension_semantics = [#tpu.dimension_semantics<parallel>], iteration_bounds = array<i64: 1>, scalar_prefetch = 0 : i64, scratch_operands = 0 : i64, tpu.core_type = #tpu.core_type<tc>, window_params = [{transform_indices = @transform_0, window_bounds = array<i64: 2, 4, 256>}, {transform_indices = @transform_1, window_bounds = array<i64: 1>}, {transform_indices = @transform_2, window_bounds = array<i64: 2, 4, 256>}]} {
    %c0 = arith.constant 0 : index
    %c0_0 = arith.constant 0 : index
    %c0_1 = arith.constant 0 : index
    %0 = vector.load %arg1[%c0, %c0_0, %c0_1] : memref<2x4x256xf32, #tpu.memory_space<vmem>>, vector<2x4x256xf32>
    "tpu.trace_start"() <{level = 10 : i32, message = "bcx,bdx->bcd"}> : () -> ()
    %cst = arith.constant dense<0.000000e+00> : vector<2x4x4xf32>
    %1 = tpu.matmul %0, %0, %cst {dimension_numbers = #tpu.dot_dimension_numbers<[2], [2], [1], [1], [0, 0, 0, 1, 1, 1], [0], [0]>} : vector<2x4x256xf32>, vector<2x4x256xf32>, vector<2x4x4xf32> -> vector<2x4x4xf32>
    "tpu.trace_stop"() : () -> ()
    %cst_2 = arith.constant dense<0xFF800000> : vector<2x4xf32>
    %2 = vector.multi_reduction <maximumf>, %1, %cst_2 [2] : vector<2x4x4xf32> to vector<2x4xf32>
    %3 = vector.shape_cast %2 : vector<2x4xf32> to vector<2x4x1xf32>
    %4 = vector.broadcast %3 : vector<2x4x1xf32> to vector<2x4x4xf32>
    %5 = arith.subf %1, %4 : vector<2x4x4xf32>
    %6 = math.exp %5 : vector<2x4x4xf32>
    %cst_3 = arith.constant dense<0.000000e+00> : vector<2x4xf32>
    %7 = vector.multi_reduction <add>, %6, %cst_3 [2] : vector<2x4x4xf32> to vector<2x4xf32>
    %8 = vector.shape_cast %7 : vector<2x4xf32> to vector<2x4x1xf32>
    %9 = vector.broadcast %8 : vector<2x4x1xf32> to vector<2x4x4xf32>
    %10 = arith.divf %6, %9 : vector<2x4x4xf32>
    "tpu.trace_start"() <{level = 10 : i32, message = "bcd,bdx->bcx"}> : () -> ()
    %cst_4 = arith.constant dense<0.000000e+00> : vector<2x4x256xf32>
    %11 = tpu.matmul %10, %0, %cst_4 {dimension_numbers = #tpu.dot_dimension_numbers<[2], [1], [1], [2], [0, 0, 0, 1, 1, 2], [0], [0]>} : vector<2x4x4xf32>, vector<2x4x256xf32>, vector<2x4x256xf32> -> vector<2x4x256xf32>
    "tpu.trace_stop"() : () -> ()
    %c0_5 = arith.constant 0 : index
    %12 = memref.load %arg2[%c0_5] : memref<1xf32, #tpu.memory_space<smem>>
    %13 = vector.broadcast %12 : f32 to vector<2x4x256xf32>
    %14 = arith.mulf %13, %11 : vector<2x4x256xf32>
    %c0_6 = arith.constant 0 : index
    %c0_7 = arith.constant 0 : index
    %c0_8 = arith.constant 0 : index
    %15 = vector.load %arg3[%c0_6, %c0_7, %c0_8] : memref<2x4x256xf32, #tpu.memory_space<vmem>>, vector<2x4x256xf32>
    tpu.vector_store %arg3[%c0_6, %c0_7, %c0_8], %14 {strides = array<i32>} : memref<2x4x256xf32, #tpu.memory_space<vmem>>, vector<2x4x256xf32>,
    return
  }
  func.func @transform_0(%arg0: i32) -> (i32, i32, i32) {
    %c0_i32 = arith.constant 0 : i32
    %c0_i32_0 = arith.constant 0 : i32
    %c0_i32_1 = arith.constant 0 : i32
    return %arg0, %c0_i32, %c0_i32_0 : i32, i32, i32
  }
  func.func @transform_1(%arg0: i32) -> i32 {
    %c0_i32 = arith.constant 0 : i32
    %c0_i32_0 = arith.constant 0 : i32
    return %c0_i32 : i32
  }
  func.func @transform_2(%arg0: i32) -> (i32, i32, i32) {
    %c0_i32 = arith.constant 0 : i32
    %c0_i32_0 = arith.constant 0 : i32
    %c0_i32_1 = arith.constant 0 : i32
    return %arg0, %c0_i32, %c0_i32_0 : i32, i32, i32
  }
}

</mosaic_0001>

<llo_original>
// kernel: tpu_custom_call.1
$region0: #{tpu_custom_call.1}
  #allocation0 [shape = 'u32[]', space=smem, size = 0x4, offset = 0x4, fixed_abs, tag = 'smem constant byte address 0x4 - core index']
  #allocation1 [shape = 'u32[72,128]{1,0:T(1,128)}', space=vmem, size = 0x9000, scoped, tag = 'internal scratch']
  #allocation2 [shape = 'f32[1]{0:T(128)S(6)}', space=smem, size = 0x200, scoped, tag = 'scoped memory for tpu_custom_call.1']
  %s0 = inlined_call_operand.hbm [shape: f32[2,4,256], index: 0, kind: input, shape index: {}]
  %s1 = inlined_call_operand.<no memory space> [shape: f32[1], index: 1, kind: input, shape index: {}]
  %s2 = inlined_call_operand.hbm [shape: f32[2,4,256], index: 2, kind: output, shape index: {}]
  %s3 = sld [smem:[#allocation0]]
  $region22: #{tpu_custom_call.1} parent=0
    _
  %s5 = ssub.s32 1, %s3
  %s6 = scalar_select 0, %s5, %s3
  %7 = sst [smem:[#allocation2]] %s1
  $region1: #{tpu_custom_call.1} parent=0
    #allocation3 [shape = 'u8[8192]{0}', space=vmem, size = 0x2000, scoped, tag = 'input window, operand 0, single buffered']
    #allocation4 [shape = 's32[1]{0}', space=sflag, size = 0x4, scoped, tag = 'scoped memory for tpu_custom_call.1']
    #allocation5 [shape = 's32[1]{0}', space=sflag, size = 0x4, scoped, tag = 'scoped memory for tpu_custom_call.1']
    #allocation6 [shape = 'u8[8192]{0}', space=vmem, size = 0x2000, scoped, tag = 'output window, operand 0, single buffered']
    %8 = vsyncpa [#allocation4], 0
    %9 = vsyncpa [#allocation5], 0
    // Predicated region
    $region2: #{tpu_custom_call.1} parent=1 // pred_check
      _
    $region3: #{tpu_custom_call.1} parent=1 // pred_check_branch
      %11 = sbr.rel (0) target = $region5
    $region4: #{tpu_custom_call.1} parent=1 // pred_region
      %13 = vsyncadd [#allocation4], 0
      %s14 = sshll.u32 %s0, 4
      %s15 = int_to_ptr.hbm [resolvable:$true] %s14
      %s16 = sshll.u32 [#allocation3], 4
      %s17 = int_to_ptr.vmem [resolvable:$true] %s16
      %22 = dma.hbm_to_vmem [thread:$0]  %s15, 256, %s17, [#allocation4], 128, 128, 8
    $region5: #{tpu_custom_call.1} parent=1 // pred_fallthru
      _
    // Predicated region
    $region6: #{tpu_custom_call.1} parent=1 // pred_check
      _
    $region7: #{tpu_custom_call.1} parent=1 // pred_check_branch
      %24 = sbr.rel (0) target = $region9
    $region8: #{tpu_custom_call.1} parent=1 // pred_region
      _
    $region9: #{tpu_custom_call.1} parent=1 // pred_fallthru
      _
    // Predicated region
    $region10: #{tpu_custom_call.1} parent=1 // pred_check
      _
    $region11: #{tpu_custom_call.1} parent=1 // pred_check_branch
      %26 = sbr.rel (0) target = $region13
    $region12: #{tpu_custom_call.1} parent=1 // pred_region
      %28 = dma.done [#allocation4], 256
    $region13: #{tpu_custom_call.1} parent=1 // pred_fallthru
      _
    %v29 = vld [vmem:[#allocation3] sm:$0xff]
    %v30 = vld [vmem:[#allocation3 + $0x8] sm:$0xff]
    %32 = vst [vmem:[#allocation1] ss:$2 sm:$0xff] %v29
    %v33 = vld.sshfl [vmem:[#allocation1] sm:$0xff pattern:$0x75316420]
    %v34 = vld.sshfl [vmem:[#allocation1 + $0x8] sm:$0xff pattern:$0x75316420]
    %37 = vst [vmem:[#allocation1] ss:$2 sm:$0xff] %v29
    %v38 = vld.sshfl [vmem:[#allocation1] sm:$0xff pattern:$0x75316420]
    %v39 = vld.sshfl [vmem:[#allocation1 + $0x8] sm:$0xff pattern:$0x75316420]
    %42 = vmatpush.xpose.msra.mxu0 0.0
    %43 = vmatpush.xpose.msra.mxu0 0.0
    %44 = vmatpush.xpose.msra.mxu0 0.0
    %45 = vmatpush.xpose.msra.mxu0 0.0
    %46 = vmatpush.xpose.msra.mxu0 0.0
    %47 = vmatpush.xpose.msra.mxu0 0.0
    %48 = vmatpush.xpose.msra.mxu0 0.0
    %49 = vmatpush.xpose.msra.mxu0 0.0
    %50 = vmatpush.xpose.msra.mxu0 0.0
    %51 = vmatpush.xpose.msra.mxu0 0.0
    %52 = vmatpush.xpose.msra.mxu0 0.0
    %53 = vmatpush.xpose.msra.mxu0 0.0
    %54 = vmatpush.xpose.msra.mxu0 0.0
    %55 = vmatpush.xpose.msra.mxu0 0.0
    %56 = vmatpush.xpose.msra.mxu0 0.0
    %57 = vmatpush.xpose.msra.mxu0 %v38
    %58 = vmatmul.f32.gmra.mxu0 %v33
    %v59 = vpop.f32.mrf.mxu0
    %v60 = vadd.f32 0.0, %v59
    %61 = vdwg.mxu0
    %62 = vmatpush.xpose.msra.mxu0 0.0
    %63 = vmatpush.xpose.msra.mxu0 0.0
    %64 = vmatpush.xpose.msra.mxu0 0.0
    %65 = vmatpush.xpose.msra.mxu0 0.0
    %66 = vmatpush.xpose.msra.mxu0 0.0
    %67 = vmatpush.xpose.msra.mxu0 0.0
    %68 = vmatpush.xpose.msra.mxu0 0.0
    %69 = vmatpush.xpose.msra.mxu0 0.0
    %70 = vmatpush.xpose.msra.mxu0 0.0
    %71 = vmatpush.xpose.msra.mxu0 0.0
    %72 = vmatpush.xpose.msra.mxu0 0.0
    %73 = vmatpush.xpose.msra.mxu0 0.0
    %74 = vmatpush.xpose.msra.mxu0 0.0
    %75 = vmatpush.xpose.msra.mxu0 0.0
    %76 = vmatpush.xpose.msra.mxu0 0.0
    %77 = vmatpush.xpose.msra.mxu0 %v39
    %78 = vmatmul.f32.gmra.mxu0 %v34
    %v79 = vpop.f32.mrf.mxu0
    %v80 = vadd.f32 %v60, %v79
    %81 = vdwg.mxu0
    %83 = vst [vmem:[#allocation1] ss:$2 sm:$0xff] %v30
    %v84 = vld.sshfl [vmem:[#allocation1] sm:$0xff pattern:$0x75316420]
    %v85 = vld.sshfl [vmem:[#allocation1 + $0x8] sm:$0xff pattern:$0x75316420]
    %88 = vst [vmem:[#allocation1] ss:$2 sm:$0xff] %v30
    %v89 = vld.sshfl [vmem:[#allocation1] sm:$0xff pattern:$0x75316420]
    %v90 = vld.sshfl [vmem:[#allocation1 + $0x8] sm:$0xff pattern:$0x75316420]
    %93 = vmatpush.xpose.msra.mxu0 0.0
    %94 = vmatpush.xpose.msra.mxu0 0.0
    %95 = vmatpush.xpose.msra.mxu0 0.0
    %96 = vmatpush.xpose.msra.mxu0 0.0
    %97 = vmatpush.xpose.msra.mxu0 0.0
    %98 = vmatpush.xpose.msra.mxu0 0.0
    %99 = vmatpush.xpose.msra.mxu0 0.0
    %100 = vmatpush.xpose.msra.mxu0 0.0
    %101 = vmatpush.xpose.msra.mxu0 0.0
    %102 = vmatpush.xpose.msra.mxu0 0.0
    %103 = vmatpush.xpose.msra.mxu0 0.0
    %104 = vmatpush.xpose.msra.mxu0 0.0
    %105 = vmatpush.xpose.msra.mxu0 0.0
    %106 = vmatpush.xpose.msra.mxu0 0.0
    %107 = vmatpush.xpose.msra.mxu0 0.0
    %108 = vmatpush.xpose.msra.mxu0 %v89
    %109 = vmatmul.f32.gmra.mxu0 %v84
    %v110 = vpop.f32.mrf.mxu0
    %v111 = vadd.f32 0.0, %v110
    %112 = vdwg.mxu0
    %113 = vmatpush.xpose.msra.mxu0 0.0
    %114 = vmatpush.xpose.msra.mxu0 0.0
    %115 = vmatpush.xpose.msra.mxu0 0.0
    %116 = vmatpush.xpose.msra.mxu0 0.0
    %117 = vmatpush.xpose.msra.mxu0 0.0
    %118 = vmatpush.xpose.msra.mxu0 0.0
    %119 = vmatpush.xpose.msra.mxu0 0.0
    %120 = vmatpush.xpose.msra.mxu0 0.0
    %121 = vmatpush.xpose.msra.mxu0 0.0
    %122 = vmatpush.xpose.msra.mxu0 0.0
    %123 = vmatpush.xpose.msra.mxu0 0.0
    %124 = vmatpush.xpose.msra.mxu0 0.0
    %125 = vmatpush.xpose.msra.mxu0 0.0
    %126 = vmatpush.xpose.msra.mxu0 0.0
    %127 = vmatpush.xpose.msra.mxu0 0.0
    %128 = vmatpush.xpose.msra.mxu0 %v90
    %129 = vmatmul.f32.gmra.mxu0 %v85
    %v130 = vpop.f32.mrf.mxu0
    %v131 = vadd.f32 %v111, %v130
    %132 = vdwg.mxu0
    %vm133 = vcmask 27648
    %v134 = vsel %vm133, %v80, -inf
    %135 = vmax.xlane.f32.xlu0 %v134
    %v136 = vpop.xlane.xlu0 %135
    %v137 = vsel %vm133, %v131, -inf
    %138 = vmax.xlane.f32.xlu0 %v137
    %v139 = vpop.xlane.xlu0 %138
    %v140 = vsub.f32 %v80, %v136
    %v141 = vsub.f32 %v131, %v139
    %v142 = vmul.f32 %v140, 1.442695
    %v143 = vpow.pop %v142
    %v144 = vmul.f32 %v141, 1.442695
    %v145 = vpow.pop %v144
    %v146 = vsel %vm133, %v143, 0.0
    %147 = vadd.xlane.f32.xlu0 %v146
    %v148 = vpop.xlane.xlu0 %147
    %v149 = vsel %vm133, %v145, 0.0
    %150 = vadd.xlane.f32.xlu0 %v149
    %v151 = vpop.xlane.xlu0 %150
    %v152 = vrcp.pop %v148
    %v153 = vmul.f32 %v148, %v152
    %v154 = vsub.f32 1.0, %v153
    %v155 = vmul.f32 %v152, %v154
    %v156 = vadd.f32 %v152, %v155
    %vm157 = vweird.f32 %v148
    %vm158 = vweird.f32 %v152
    %vm159 = vmor %vm157, %vm158
    %v160 = vsel %vm159, %v152, %v156
    %v161 = vand.u32 2147483647, %v148
    %vm162 = vcmp.eq.f32.partialorder %v161, 8.507059e+37
    %v163 = vand.u32 %v148, 2147483648
    %v164 = vor.u32 1.1754944e-38, %v163
    %v165 = vsel %vm162, %v164, %v160
    %v166 = vmul.f32 %v143, %v165
    %v167 = vrcp.pop %v151
    %v168 = vmul.f32 %v151, %v167
    %v169 = vsub.f32 1.0, %v168
    %v170 = vmul.f32 %v167, %v169
    %v171 = vadd.f32 %v167, %v170
    %vm172 = vweird.f32 %v151
    %vm173 = vweird.f32 %v167
    %vm174 = vmor %vm172, %vm173
    %v175 = vsel %vm174, %v167, %v171
    %v176 = vand.u32 2147483647, %v151
    %vm177 = vcmp.eq.f32.partialorder %v176, 8.507059e+37
    %v178 = vand.u32 %v151, 2147483648
    %v179 = vor.u32 1.1754944e-38, %v178
    %v180 = vsel %vm177, %v179, %v175
    %v181 = vmul.f32 %v145, %v180
    %182 = vst [vmem:[#allocation1] ss:$2 sm:$0xff] %v29
    %v183 = vld.sshfl [vmem:[#allocation1] sm:$0xff pattern:$0x75316420]
    %v184 = vld.sshfl [vmem:[#allocation1 + $0x8] sm:$0xff pattern:$0x75316420]
    %vm185 = vcmask 31744
    %v187 = vsel %vm185, %v166, 0
    %vm189 = vcmask 1043456
    %v190 = vsel %vm189, %v183, 0
    %v192 = vsel %vm189, %v184, 0
    %194 = vmatpush.msra.mxu0 0.0
    %195 = vmatpush.msra.mxu0 0.0
    %196 = vmatpush.msra.mxu0 0.0
    %197 = vmatpush.msra.mxu0 0.0
    %198 = vmatpush.msra.mxu0 0.0
    %199 = vmatpush.msra.mxu0 0.0
    %200 = vmatpush.msra.mxu0 0.0
    %201 = vmatpush.msra.mxu0 0.0
    %202 = vmatpush.msra.mxu0 0.0
    %203 = vmatpush.msra.mxu0 0.0
    %204 = vmatpush.msra.mxu0 0.0
    %205 = vmatpush.msra.mxu0 0.0
    %206 = vmatpush.msra.mxu0 0.0
    %207 = vmatpush.msra.mxu0 0.0
    %208 = vmatpush.msra.mxu0 0.0
    %209 = vmatpush.msra.mxu0 %v190
    %210 = vmatmul.f32.gmra.mxu0 %v187
    %v211 = vpop.f32.mrf.mxu0
    %v212 = vadd.f32 0.0, %v211
    %213 = vdwg.mxu0
    %214 = vmatpush.msra.mxu0 0.0
    %215 = vmatpush.msra.mxu0 0.0
    %216 = vmatpush.msra.mxu0 0.0
    %217 = vmatpush.msra.mxu0 0.0
    %218 = vmatpush.msra.mxu0 0.0
    %219 = vmatpush.msra.mxu0 0.0
    %220 = vmatpush.msra.mxu0 0.0
    %221 = vmatpush.msra.mxu0 0.0
    %222 = vmatpush.msra.mxu0 0.0
    %223 = vmatpush.msra.mxu0 0.0
    %224 = vmatpush.msra.mxu0 0.0
    %225 = vmatpush.msra.mxu0 0.0
    %226 = vmatpush.msra.mxu0 0.0
    %227 = vmatpush.msra.mxu0 0.0
    %228 = vmatpush.msra.mxu0 0.0
    %229 = vmatpush.msra.mxu0 %v192
    %230 = vmatmul.f32.gmra.mxu0 %v187
    %v231 = vpop.f32.mrf.mxu0
    %v232 = vadd.f32 0.0, %v231
    %233 = vdwg.mxu0
    %234 = vst [vmem:[#allocation1] ss:$2 sm:$0xff] %v30
    %v235 = vld.sshfl [vmem:[#allocation1] sm:$0xff pattern:$0x75316420]
    %v236 = vld.sshfl [vmem:[#allocation1 + $0x8] sm:$0xff pattern:$0x75316420]
    %v238 = vsel %vm185, %v181, 0
    %v240 = vsel %vm189, %v235, 0
    %v242 = vsel %vm189, %v236, 0
    %244 = vmatpush.msra.mxu0 0.0
    %245 = vmatpush.msra.mxu0 0.0
    %246 = vmatpush.msra.mxu0 0.0
    %247 = vmatpush.msra.mxu0 0.0
    %248 = vmatpush.msra.mxu0 0.0
    %249 = vmatpush.msra.mxu0 0.0
    %250 = vmatpush.msra.mxu0 0.0
    %251 = vmatpush.msra.mxu0 0.0
    %252 = vmatpush.msra.mxu0 0.0
    %253 = vmatpush.msra.mxu0 0.0
    %254 = vmatpush.msra.mxu0 0.0
    %255 = vmatpush.msra.mxu0 0.0
    %256 = vmatpush.msra.mxu0 0.0
    %257 = vmatpush.msra.mxu0 0.0
    %258 = vmatpush.msra.mxu0 0.0
    %259 = vmatpush.msra.mxu0 %v240
    %260 = vmatmul.f32.gmra.mxu0 %v238
    %v261 = vpop.f32.mrf.mxu0
    %v262 = vadd.f32 0.0, %v261
    %263 = vdwg.mxu0
    %264 = vmatpush.msra.mxu0 0.0
    %265 = vmatpush.msra.mxu0 0.0
    %266 = vmatpush.msra.mxu0 0.0
    %267 = vmatpush.msra.mxu0 0.0
    %268 = vmatpush.msra.mxu0 0.0
    %269 = vmatpush.msra.mxu0 0.0
    %270 = vmatpush.msra.mxu0 0.0
    %271 = vmatpush.msra.mxu0 0.0
    %272 = vmatpush.msra.mxu0 0.0
    %273 = vmatpush.msra.mxu0 0.0
    %274 = vmatpush.msra.mxu0 0.0
    %275 = vmatpush.msra.mxu0 0.0
    %276 = vmatpush.msra.mxu0 0.0
    %277 = vmatpush.msra.mxu0 0.0
    %278 = vmatpush.msra.mxu0 0.0
    %279 = vmatpush.msra.mxu0 %v242
    %280 = vmatmul.f32.gmra.mxu0 %v238
    %v281 = vpop.f32.mrf.mxu0
    %v282 = vadd.f32 0.0, %v281
    %283 = vdwg.mxu0
    %s284 = sld [smem:[#allocation2]]
    %v285 = vstv %s284
    %v286 = vmul.f32 %v285, %v212
    %v287 = vmul.f32 %v285, %v232
    %v288 = vmul.f32 %v285, %v262
    %v289 = vmul.f32 %v285, %v282
    %v294 = vrot.slane %v287, 4
    %v295 = vrot.slane %v289, 4
    %v296 = vsel %vm189, %v286, %v294
    %v297 = vsel %vm189, %v288, %v295
    %300 = vst [vmem:[#allocation6] sm:$0xff] %v296
    %301 = vst [vmem:[#allocation6 + $0x8] sm:$0xff] %v297
    // Predicated region
    $region14: #{tpu_custom_call.1} parent=1 // pred_check
      _
    $region15: #{tpu_custom_call.1} parent=1 // pred_check_branch
      %303 = sbr.rel (0) target = $region17
    $region16: #{tpu_custom_call.1} parent=1 // pred_region
      %305 = vsyncadd [#allocation5], 0
      %s306 = sshll.u32 [#allocation6], 4
      %s307 = int_to_ptr.vmem [resolvable:$true] %s306
      %s308 = sshll.u32 %s2, 4
      %s309 = int_to_ptr.hbm [resolvable:$true] %s308
      %314 = dma.vmem_to_hbm [thread:$0]  %s307, 256, %s309, [#allocation5], 128, 128, 8
    $region17: #{tpu_custom_call.1} parent=1 // pred_fallthru
      _
    // Predicated region
    $region18: #{tpu_custom_call.1} parent=1 // pred_check
      _
    $region19: #{tpu_custom_call.1} parent=1 // pred_check_branch
      %316 = sbr.rel (0) target = $region21
    $region20: #{tpu_custom_call.1} parent=1 // pred_region
      %318 = dma.done [#allocation5], 256
    $region21: #{tpu_custom_call.1} parent=1 // pred_fallthru
      _
    %319 = vsyncpa [#allocation4], 1
    %320 = vsyncpa [#allocation5], 1

</llo_original>
